<compile_context>
chip_gen: v5e
topology: v5e:2x2
jax: 0.10.0
libtpu: 0.0.40
codegen_flags: <defaults>
</compile_context>

<pallas_src>
import functools
import math

import numpy as np
import jax
import jax.numpy as jnp
from jax.experimental import pallas as pl
from jax.experimental.pallas import tpu as pltpu


# -----------------------------------------------------------------------------
# TK buffers: kernel mus / sigmas / sinusoidal positional features
# -----------------------------------------------------------------------------
def kernel_mus(n_kernels):
    l_mu = [1.0]
    if n_kernels == 1:
        return l_mu
    bin_size = 2.0 / (n_kernels - 1)
    l_mu.append(1 - bin_size / 2)
    for i in range(1, n_kernels - 1):
        l_mu.append(l_mu[i] - bin_size)
    return l_mu


def kernel_sigmas(n_kernels):
    bin_size = 2.0 / (n_kernels - 1)
    l_sigma = [0.0001]
    if n_kernels == 1:
        return l_sigma
    l_sigma += [0.5 * bin_size] * (n_kernels - 1)
    return l_sigma


def get_positional_features(dimensions, max_length,
                            min_timescale=1.0, max_timescale=1.0e4):
    timesteps = jnp.arange(max_length, dtype=jnp.float32)
    num_timescales = dimensions // 2
    timescale_range = jnp.arange(num_timescales, dtype=jnp.float32)
    log_inc = math.log(float(max_timescale) / float(min_timescale)) / float(
        num_timescales - 1)
    inverse_timescales = min_timescale * jnp.exp(timescale_range * -log_inc)
    scaled_time = timesteps[:, None] * inverse_timescales[None, :]
    sinusoids = jnp.concatenate(
        [jnp.sin(scaled_time), jnp.cos(scaled_time)], axis=1)
    if dimensions % 2 != 0:
        sinusoids = jnp.concatenate(
            [sinusoids, jnp.zeros((max_length, 1), jnp.float32)], axis=1)
    return sinusoids[None, :, :]  # (1, max_length, D)


# -----------------------------------------------------------------------------
# Plain-JAX glue: transformer-encoder contextualizer (post-norm, relu, drop=0)
# -----------------------------------------------------------------------------
def _layer_norm(x, w, b, eps=1e-5):
    m = jnp.mean(x, axis=-1, keepdims=True)
    v = jnp.mean((x - m) ** 2, axis=-1, keepdims=True)
    return (x - m) / jnp.sqrt(v + eps) * w + b


def _encoder_layer(x, pad_mask, lp, n_heads):
    # x: (B, S, D); pad_mask: (B, S) True where the token is padding.
    B, S, D = x.shape
    hd = D // n_heads
    qkv = x @ lp["in_w"].T + lp["in_b"]          # (B, S, 3D)
    q, k, v = jnp.split(qkv, 3, axis=-1)

    def split_heads(t):
        return t.reshape(B, S, n_heads, hd).transpose(0, 2, 1, 3)

    q, k, v = split_heads(q), split_heads(k), split_heads(v)
    logits = jnp.einsum("bhqe,bhke->bhqk", q, k) / math.sqrt(hd)
    logits = jnp.where(pad_mask[:, None, None, :], -1e30, logits)
    attn = jax.nn.softmax(logits, axis=-1)
    ctx = jnp.einsum("bhqk,bhke->bhqe", attn, v)
    ctx = ctx.transpose(0, 2, 1, 3).reshape(B, S, D)
    attn_out = ctx @ lp["out_w"].T + lp["out_b"]

    x = _layer_norm(x + attn_out, lp["ln1_w"], lp["ln1_b"])
    ff = jax.nn.relu(x @ lp["ff1_w"].T + lp["ff1_b"]) @ lp["ff2_w"].T + lp["ff2_b"]
    x = _layer_norm(x + ff, lp["ln2_w"], lp["ln2_b"])
    return x


def contextualize(emb, mask, pos_feat, layers, n_heads):
    x = emb + pos_feat[:, : emb.shape[1], :]
    pad_mask = mask == 0.0
    for lp in layers:
        x = _encoder_layer(x, pad_mask, lp, n_heads)
    return x


# -----------------------------------------------------------------------------
# Pallas kernel: batched cosine matrix + Gaussian kernel pooling + score
# -----------------------------------------------------------------------------
def _tk_score_kernel(q_ref, d_ref, qm_ref, dm_ref, alpha_ref, w_ref, out_ref,
                     *, mus, nis, bco, cco, exact, exp_dtype):
    """Scores a block of Bt (query, document) pairs per grid step.

    q_ref  : (Bt, Lq, D)  bf16 unit-normalized query embeddings
    d_ref  : (Bt, Ld, D)  bf16 unit-normalized document embeddings
    qm_ref : (Bt, Lq)     f32 query mask (1.0 = real token)
    dm_ref : (Bt, Ld)     f32 document mask
    alpha_ref, w_ref : (K,) f32 SMEM (learned alpha scaler / bin weights)
    out_ref: (Bt, 128)    f32 — per-pair score replicated across all lanes
                          (tile-aligned dense store; wrapper reads lane 0).
    mus/nis/bco/cco/exact: per-bin Python constants baked into the kernel.
    """
    q = q_ref[...]
    d = d_ref[...]
    qm = qm_ref[...]
    dm = dm_ref[...]

    # Batched cosine matrices on the MXU, f32 accumulation: (Bt, Lq, Ld).
    cos = jnp.einsum("bqd,bkd->bqk", q, d, preferred_element_type=jnp.float32)

    # Fold the document mask in ONCE: padded doc columns get a huge negative
    # "cosine", so exp(nis*(cos-mu)^2) underflows to exactly 0 for every bin
    # — identical to multiplying kr by the 0/1 doc mask per bin.
    cos = jnp.where(dm[:, None, :] > 0.0, cos, -1e3)
    cos2 = cos * cos                                # hoisted out of the bin loop

    acc = jnp.zeros(qm.shape, jnp.float32)          # (Bt, Lq)
    for k in range(len(nis)):                       # static unroll over bins
        if exact[k]:
            # Exact-match bin (sigma=1e-4): the expanded polynomial cancels
            # catastrophically near cos≈1, keep the (cos-mu)^2 form.
            # TODO(synk): cos comes from bf16 operands, so a true exact match
            # lands at cos≈1±1e-3 and this bin still underflows vs. the f32
            # reference; recover with an f32/HIGHEST-precision cosine pass if
            # the exact-term-match signal matters in production.
            diff = cos - mus[k]
            arg = diff * diff * nis[k]
        else:
            # arg_k = nis_k*cos^2 + b_k*cos + c_k  ==  nis_k*(cos - mu_k)^2
            arg = cos2 * nis[k] + cos * bco[k] + cco[k]
        # v6e/v7x: the EUP is the binding VLIW slot (K exps per cos element);
        # packed-bf16 exp roughly doubles its throughput.  v5e has no bf16
        # EUP, so exp_dtype stays f32 there.  Sums stay f32.
        kr = jnp.exp(arg.astype(exp_dtype)).astype(jnp.float32)
        # TODO(synk): if a bundle profile shows the XLU (not the EUP) binding,
        # replace this lane reduction with a dot against a ones (Ld, 1) vector
        # so it rides the otherwise-idle MXU.
        pkq = jnp.sum(kr, axis=-1)                  # (Bt, Lq)  doc-axis sum
        lkq = jnp.log(jnp.maximum(pkq * alpha_ref[k], 1e-10))
        acc = acc + lkq * w_ref[k]

    # Query mask + Lq reduction applied once.  A tiny matmul against a ones
    # (Lq, 128) matrix both reduces over Lq on the (idle) MXU and lands the
    # per-pair score replicated across a dense, tile-aligned (Bt, 128) slab.
    masked = acc * qm                               # (Bt, Lq)
    ones_l = jnp.ones((masked.shape[-1], 128), jnp.float32)
    out_ref[...] = jnp.dot(masked, ones_l, preferred_element_type=jnp.float32)


def _vmem_need_bytes(bb, Lq, Ld, D):
    tiles = 2 * bb * (Lq + Ld) * D * 2        # double-buffered bf16 q/d tiles
    masks = 2 * bb * (Lq + Ld) * 4            # double-buffered f32 masks
    outs = 2 * bb * 128 * 4                   # double-buffered output slab
    temps = 3 * bb * Lq * Ld * 4              # cos, cos2, one live kr
    return tiles + masks + outs + temps


def _pick_block_b(B, Lq, Ld, D, budget_bytes=20 << 20):
    """Batch-block size from a VMEM budget.

    block_b is NOT an MXU knob: each pair is an independent tiny (Lq,D)x(D,Ld)
    matmul with no RHS reuse, so it only amortizes per-step grid overhead /
    DMA.  It must (a) fit the VMEM budget with double-buffered tiles and
    (b) leave >= 2 grid steps so both v7x TensorCores get work.
    """
    if B <= 8:
        return B                              # single block == full (tiny) batch
    bb = min(128, (B // 8) * 8)               # multiple of 8 (mask sublane tile)
    if -(-B // bb) < 2:                       # ensure >= 2 grid steps (v7x)
        bb = max(8, (B // 2 // 8) * 8)
    while bb > 8 and _vmem_need_bytes(bb, Lq, Ld, D) > budget_bytes:
        bb -= 8
    return bb


def _has_bf16_eup():
    # v6e / v7x EUPs handle packed-bf16 transcendentals; v5e / v4 do not.
    try:
        kind = jax.devices()[0].device_kind.lower()
    except Exception:
        return False
    return ("v6" in kind) or ("v7" in kind)


def tk_score_pallas(q_ctx, d_ctx, q_mask, d_mask, mu, sigma, alpha, w,
                    block_b=None, use_bf16_exp=None):
    B, Lq, D = q_ctx.shape
    _, Ld, _ = d_ctx.shape

    # Gaussian-bin constants are fixed TK buffers: bake them into the kernel
    # as Python scalars (no SMEM loads); only the learned alpha / bin weights
    # stay as SMEM inputs.
    mu_np = np.asarray(mu, np.float64).reshape(-1)
    sg_np = np.asarray(sigma, np.float64).reshape(-1)
    nis_np = -1.0 / (2.0 * sg_np * sg_np)
    mus = tuple(float(v) for v in mu_np)
    nis = tuple(float(v) for v in nis_np)
    bco = tuple(float(v) for v in (-2.0 * nis_np * mu_np))
    cco = tuple(float(v) for v in (nis_np * mu_np * mu_np))
    exact = tuple(bool(s < 1e-3) for s in sg_np)

    # Pre-normalize in f32 here and ship bf16 unit vectors to the kernel:
    # halves HBM->VMEM DMA and the double-buffered q/d tiles, zero precision
    # change (the cosine matmul operands were already bf16).
    qh = (q_ctx * jax.lax.rsqrt(
        jnp.sum(q_ctx * q_ctx, axis=-1, keepdims=True) + 1e-26)
          ).astype(jnp.bfloat16)
    dh = (d_ctx * jax.lax.rsqrt(
        jnp.sum(d_ctx * d_ctx, axis=-1, keepdims=True) + 1e-26)
          ).astype(jnp.bfloat16)
    qm = q_mask.astype(jnp.float32)                 # (B, Lq) lane-major
    dm = d_mask.astype(jnp.float32)                 # (B, Ld)

    if block_b is None:
        block_b = _pick_block_b(B, Lq, Ld, D)
    G = -(-B // block_b)
    Bp = G * block_b
    if Bp != B:
        pad = Bp - B
        qh = jnp.pad(qh, ((0, pad), (0, 0), (0, 0)))
        dh = jnp.pad(dh, ((0, pad), (0, 0), (0, 0)))
        qm = jnp.pad(qm, ((0, pad), (0, 0)))
        dm = jnp.pad(dm, ((0, pad), (0, 0)))

    if use_bf16_exp is None:
        use_bf16_exp = _has_bf16_eup()
    exp_dtype = jnp.bfloat16 if use_bf16_exp else jnp.float32

    need = _vmem_need_bytes(block_b, Lq, Ld, D)
    vmem_limit = int(min(48 << 20, max(32 << 20, need + (8 << 20))))

    kernel = functools.partial(_tk_score_kernel, mus=mus, nis=nis, bco=bco,
                               cco=cco, exact=exact, exp_dtype=exp_dtype)

    out = pl.pallas_call(
        kernel,
        out_shape=jax.ShapeDtypeStruct((Bp, 128), jnp.float32),
        grid=(G,),
        in_specs=[
            pl.BlockSpec((block_b, Lq, D), lambda g: (g, 0, 0)),
            pl.BlockSpec((block_b, Ld, D), lambda g: (g, 0, 0)),
            pl.BlockSpec((block_b, Lq), lambda g: (g, 0)),
            pl.BlockSpec((block_b, Ld), lambda g: (g, 0)),
            pl.BlockSpec(memory_space=pltpu.MemorySpace.SMEM),   # alpha scaler
            pl.BlockSpec(memory_space=pltpu.MemorySpace.SMEM),   # bin weights
        ],
        out_specs=pl.BlockSpec((block_b, 128), lambda g: (g, 0)),
        compiler_params=pltpu.CompilerParams(
            dimension_semantics=("parallel",),
            vmem_limit_bytes=vmem_limit),
    )(qh, dh, qm, dm,
      jnp.reshape(alpha, (-1,)).astype(jnp.float32),
      jnp.reshape(w, (-1,)).astype(jnp.float32))
    return out[:B, 0]


# -----------------------------------------------------------------------------
# Pure-JAX reference of the scoring stage (test-only; not in production path)
# -----------------------------------------------------------------------------
def tk_score_ref(q_ctx, d_ctx, q_mask, d_mask, mu, sigma, alpha, w):
    qn = q_ctx / (jnp.linalg.norm(q_ctx, axis=-1, keepdims=True) + 1e-13)
    dn = d_ctx / (jnp.linalg.norm(d_ctx, axis=-1, keepdims=True) + 1e-13)
    cos = jnp.einsum("bqe,bde->bqd", qn, dn)
    kr = jnp.exp(-(cos[..., None] - mu[None, None, None, :]) ** 2 /
                 (2.0 * sigma[None, None, None, :] ** 2))
    kr = kr * d_mask[:, None, :, None]
    pkq = jnp.sum(kr, axis=2)
    lkq = jnp.log(jnp.maximum(pkq * alpha[None, None, :], 1e-10))
    lkq = lkq * q_mask[..., None]
    per_kernel = jnp.sum(lkq, axis=1)
    return per_kernel @ w


# -----------------------------------------------------------------------------
# Parameter init (deterministic, synthetic)
# -----------------------------------------------------------------------------
def init_params(key, vocab, D, n_layers, n_kernels):
    keys = jax.random.split(key, 4 * n_layers + 2)
    ki = iter(keys)
    embed = jax.random.normal(next(ki), (vocab, D), jnp.float32) * 0.1
    embed = embed.at[0].set(0.0)  # padding idx 0 -> zero vector
    layers = []
    scale = 1.0 / math.sqrt(D)
    for _ in range(n_layers):
        layers.append({
            "in_w": jax.random.normal(next(ki), (3 * D, D), jnp.float32) * scale,
            "in_b": jnp.zeros((3 * D,), jnp.float32),
            "out_w": jax.random.normal(next(ki), (D, D), jnp.float32) * scale,
            "out_b": jnp.zeros((D,), jnp.float32),
            "ff1_w": jax.random.normal(next(ki), (D, D), jnp.float32) * scale,
            "ff1_b": jnp.zeros((D,), jnp.float32),
            "ff2_w": jax.random.normal(next(ki), (D, D), jnp.float32) * scale,
            "ff2_b": jnp.zeros((D,), jnp.float32),
            "ln1_w": jnp.ones((D,), jnp.float32),
            "ln1_b": jnp.zeros((D,), jnp.float32),
            "ln2_w": jnp.ones((D,), jnp.float32),
            "ln2_b": jnp.zeros((D,), jnp.float32),
        })
    kernel_bin_weights = jax.random.uniform(
        next(ki), (n_kernels,), jnp.float32, minval=-0.014, maxval=0.014)
    kernel_alpha_scaler = jnp.ones((n_kernels,), jnp.float32)
    return {"embed": embed, "layers": layers,
            "kernel_bin_weights": kernel_bin_weights,
            "kernel_alpha_scaler": kernel_alpha_scaler}


# -----------------------------------------------------------------------------
# Forward passes
# -----------------------------------------------------------------------------
def tk_forward(params, q_tokens, d_tokens, pos_feat, mu, sigma, n_heads):
    """Production forward: contextualize + Pallas scoring kernel."""
    q_mask = (q_tokens > 0).astype(jnp.float32)
    d_mask = (d_tokens > 0).astype(jnp.float32)
    q_ctx = contextualize(params["embed"][q_tokens], q_mask, pos_feat,
                          params["layers"], n_heads)
    d_ctx = contextualize(params["embed"][d_tokens], d_mask, pos_feat,
                          params["layers"], n_heads)
    return tk_score_pallas(q_ctx, d_ctx, q_mask, d_mask, mu, sigma,
                           params["kernel_alpha_scaler"],
                           params["kernel_bin_weights"])


def tk_forward_ref(params, q_tokens, d_tokens, pos_feat, mu, sigma, n_heads):
    """Pure-JAX reference forward (test-only)."""
    q_mask = (q_tokens > 0).astype(jnp.float32)
    d_mask = (d_tokens > 0).astype(jnp.float32)
    q_ctx = contextualize(params["embed"][q_tokens], q_mask, pos_feat,
                          params["layers"], n_heads)
    d_ctx = contextualize(params["embed"][d_tokens], d_mask, pos_feat,
                          params["layers"], n_heads)
    return tk_score_ref(q_ctx, d_ctx, q_mask, d_mask,
                        jnp.asarray(mu, jnp.float32),
                        jnp.asarray(sigma, jnp.float32),
                        params["kernel_alpha_scaler"],
                        params["kernel_bin_weights"])


if __name__ == "__main__":
    # small shapes consistent with the module
    B, Lq, Ld = 2, 8, 16
    n_tf_dim, n_tf_heads, n_layers, n_kernels = 32, 4, 2, 11
    vocab = 50

    key = jax.random.PRNGKey(0)
    k_param, k_q, k_d = jax.random.split(key, 3)
    params = init_params(k_param, vocab, n_tf_dim, n_layers, n_kernels)

    mu_np = np.asarray(kernel_mus(n_kernels), np.float32)
    sigma_np = np.asarray(kernel_sigmas(n_kernels), np.float32)
    pos_feat = get_positional_features(n_tf_dim, 64)

    q_tokens = jax.random.randint(k_q, (B, Lq), 1, vocab)
    d_tokens = jax.random.randint(k_d, (B, Ld), 1, vocab)
    # introduce some padding (token id 0)
    q_tokens = q_tokens.at[0, Lq - 2:].set(0)
    d_tokens = d_tokens.at[1, Ld - 5:].set(0)

    score_fn = jax.jit(functools.partial(
        tk_forward, pos_feat=pos_feat, mu=mu_np, sigma=sigma_np,
        n_heads=n_tf_heads))
    ref_fn = jax.jit(functools.partial(
        tk_forward_ref, pos_feat=pos_feat, mu=mu_np, sigma=sigma_np,
        n_heads=n_tf_heads))

    score = score_fn(params, q_tokens, d_tokens)
    jax.block_until_ready(score)
    ref = ref_fn(params, q_tokens, d_tokens)
    jax.block_until_ready(ref)

    assert score.shape == (B,)
    assert bool(jnp.all(jnp.isfinite(score)))
    assert bool(jnp.allclose(score, ref, rtol=2e-2, atol=2e-2)), (score, ref)
    print("KERNEL_OK")
</pallas_src>

<mosaic_0001>
module attributes {stable_mosaic.version = 11 : i64} {
  func.func @_tk_score_kernel(%arg0: i32, %arg1: memref<2x8x32xbf16, #tpu.memory_space<vmem>>, %arg2: memref<2x16x32xbf16, #tpu.memory_space<vmem>>, %arg3: memref<2x8xf32, #tpu.memory_space<vmem>>, %arg4: memref<2x16xf32, #tpu.memory_space<vmem>>, %arg5: memref<11xf32, #tpu.memory_space<smem>>, %arg6: memref<11xf32, #tpu.memory_space<smem>>, %arg7: memref<2x128xf32, #tpu.memory_space<vmem>>) attributes {dimension_semantics = [#tpu.dimension_semantics<parallel>], iteration_bounds = array<i64: 1>, scalar_prefetch = 0 : i64, scratch_operands = 0 : i64, tpu.core_type = #tpu.core_type<tc>, window_params = [{transform_indices = @transform_0, window_bounds = array<i64: 2, 8, 32>}, {transform_indices = @transform_1, window_bounds = array<i64: 2, 16, 32>}, {transform_indices = @transform_2, window_bounds = array<i64: 2, 8>}, {transform_indices = @transform_3, window_bounds = array<i64: 2, 16>}, {transform_indices = @transform_4, window_bounds = array<i64: 11>}, {transform_indices = @transform_5, window_bounds = array<i64: 11>}, {transform_indices = @transform_6, window_bounds = array<i64: 2, 128>}]} {
    %c0 = arith.constant 0 : index
    %c0_0 = arith.constant 0 : index
    %c0_1 = arith.constant 0 : index
    %0 = vector.load %arg1[%c0, %c0_0, %c0_1] : memref<2x8x32xbf16, #tpu.memory_space<vmem>>, vector<2x8x32xbf16>
    %c0_2 = arith.constant 0 : index
    %c0_3 = arith.constant 0 : index
    %c0_4 = arith.constant 0 : index
    %1 = vector.load %arg2[%c0_2, %c0_3, %c0_4] : memref<2x16x32xbf16, #tpu.memory_space<vmem>>, vector<2x16x32xbf16>
    %c0_5 = arith.constant 0 : index
    %c0_6 = arith.constant 0 : index
    %2 = vector.load %arg3[%c0_5, %c0_6] : memref<2x8xf32, #tpu.memory_space<vmem>>, vector<2x8xf32>
    %c0_7 = arith.constant 0 : index
    %c0_8 = arith.constant 0 : index
    %3 = vector.load %arg4[%c0_7, %c0_8] : memref<2x16xf32, #tpu.memory_space<vmem>>, vector<2x16xf32>
    "tpu.trace_start"() <{level = 10 : i32, message = "bqd,bkd->bqk"}> : () -> ()
    %cst = arith.constant dense<0.000000e+00> : vector<2x8x16xf32>
    %4 = tpu.matmul %0, %1, %cst {dimension_numbers = #tpu.dot_dimension_numbers<[2], [2], [1], [1], [0, 0, 0, 1, 1, 1], [0], [0]>} : vector<2x8x32xbf16>, vector<2x16x32xbf16>, vector<2x8x16xf32> -> vector<2x8x16xf32>
    "tpu.trace_stop"() : () -> ()
    %5 = vector.shape_cast %3 : vector<2x16xf32> to vector<2x1x16xf32>
    %cst_9 = arith.constant 0.000000e+00 : f32
    %6 = vector.broadcast %cst_9 : f32 to vector<2x1x16xf32>
    %7 = arith.cmpf ogt, %5, %6 : vector<2x1x16xf32>
    %cst_10 = arith.constant -1.000000e+03 : f32
    %8 = vector.shape_cast %7 : vector<2x1x16xi1> to vector<2x1x16xi1>
    %9 = vector.broadcast %8 : vector<2x1x16xi1> to vector<2x8x16xi1>
    %10 = vector.broadcast %cst_10 : f32 to vector<2x8x16xf32>
    %11 = arith.select %9, %4, %10 : vector<2x8x16xi1>, vector<2x8x16xf32>
    %12 = arith.mulf %11, %11 : vector<2x8x16xf32>
    %cst_11 = arith.constant 0.000000e+00 : f32
    %13 = vector.broadcast %cst_11 : f32 to vector<2x8xf32>
    %cst_12 = arith.constant 1.000000e+00 : f32
    %14 = vector.broadcast %cst_12 : f32 to vector<2x8x16xf32>
    %15 = arith.subf %11, %14 : vector<2x8x16xf32>
    %16 = arith.mulf %15, %15 : vector<2x8x16xf32>
    %cst_13 = arith.constant 0xCC3EBC21 : f32
    %17 = vector.broadcast %cst_13 : f32 to vector<2x8x16xf32>
    %18 = arith.mulf %16, %17 : vector<2x8x16xf32>
    %19 = math.exp %18 : vector<2x8x16xf32>
    %cst_14 = arith.constant dense<0.000000e+00> : vector<2x8xf32>
    %20 = vector.multi_reduction <add>, %19, %cst_14 [2] : vector<2x8x16xf32> to vector<2x8xf32>
    %c0_15 = arith.constant 0 : index
    %21 = memref.load %arg5[%c0_15] : memref<11xf32, #tpu.memory_space<smem>>
    %22 = vector.broadcast %21 : f32 to vector<2x8xf32>
    %23 = arith.mulf %20, %22 : vector<2x8xf32>
    %cst_16 = arith.constant 1.000000e-10 : f32
    %24 = vector.broadcast %cst_16 : f32 to vector<2x8xf32>
    %25 = arith.maximumf %23, %24 : vector<2x8xf32>
    %26 = math.log %25 : vector<2x8xf32>
    %c0_17 = arith.constant 0 : index
    %27 = memref.load %arg6[%c0_17] : memref<11xf32, #tpu.memory_space<smem>>
    %28 = vector.broadcast %27 : f32 to vector<2x8xf32>
    %29 = arith.mulf %26, %28 : vector<2x8xf32>
    %30 = arith.addf %13, %29 : vector<2x8xf32>
    %cst_18 = arith.constant -5.000000e+01 : f32
    %31 = vector.broadcast %cst_18 : f32 to vector<2x8x16xf32>
    %32 = arith.mulf %12, %31 : vector<2x8x16xf32>
    %cst_19 = arith.constant 89.9999924 : f32
    %33 = vector.broadcast %cst_19 : f32 to vector<2x8x16xf32>
    %34 = arith.mulf %11, %33 : vector<2x8x16xf32>
    %35 = arith.addf %32, %34 : vector<2x8x16xf32>
    %cst_20 = arith.constant -40.4999962 : f32
    %36 = vector.broadcast %cst_20 : f32 to vector<2x8x16xf32>
    %37 = arith.addf %35, %36 : vector<2x8x16xf32>
    %38 = math.exp %37 : vector<2x8x16xf32>
    %cst_21 = arith.constant dense<0.000000e+00> : vector<2x8xf32>
    %39 = vector.multi_reduction <add>, %38, %cst_21 [2] : vector<2x8x16xf32> to vector<2x8xf32>
    %c1 = arith.constant 1 : index
    %40 = memref.load %arg5[%c1] : memref<11xf32, #tpu.memory_space<smem>>
    %41 = vector.broadcast %40 : f32 to vector<2x8xf32>
    %42 = arith.mulf %39, %41 : vector<2x8xf32>
    %cst_22 = arith.constant 1.000000e-10 : f32
    %43 = vector.broadcast %cst_22 : f32 to vector<2x8xf32>
    %44 = arith.maximumf %42, %43 : vector<2x8xf32>
    %45 = math.log %44 : vector<2x8xf32>
    %c1_23 = arith.constant 1 : index
    %46 = memref.load %arg6[%c1_23] : memref<11xf32, #tpu.memory_space<smem>>
    %47 = vector.broadcast %46 : f32 to vector<2x8xf32>
    %48 = arith.mulf %45, %47 : vector<2x8xf32>
    %49 = arith.addf %30, %48 : vector<2x8xf32>
    %cst_24 = arith.constant -5.000000e+01 : f32
    %50 = vector.broadcast %cst_24 : f32 to vector<2x8x16xf32>
    %51 = arith.mulf %12, %50 : vector<2x8x16xf32>
    %cst_25 = arith.constant 7.000000e+01 : f32
    %52 = vector.broadcast %cst_25 : f32 to vector<2x8x16xf32>
    %53 = arith.mulf %11, %52 : vector<2x8x16xf32>
    %54 = arith.addf %51, %53 : vector<2x8x16xf32>
    %cst_26 = arith.constant -24.4999981 : f32
    %55 = vector.broadcast %cst_26 : f32 to vector<2x8x16xf32>
    %56 = arith.addf %54, %55 : vector<2x8x16xf32>
    %57 = math.exp %56 : vector<2x8x16xf32>
    %cst_27 = arith.constant dense<0.000000e+00> : vector<2x8xf32>
    %58 = vector.multi_reduction <add>, %57, %cst_27 [2] : vector<2x8x16xf32> to vector<2x8xf32>
    %c2 = arith.constant 2 : index
    %59 = memref.load %arg5[%c2] : memref<11xf32, #tpu.memory_space<smem>>
    %60 = vector.broadcast %59 : f32 to vector<2x8xf32>
    %61 = arith.mulf %58, %60 : vector<2x8xf32>
    %cst_28 = arith.constant 1.000000e-10 : f32
    %62 = vector.broadcast %cst_28 : f32 to vector<2x8xf32>
    %63 = arith.maximumf %61, %62 : vector<2x8xf32>
    %64 = math.log %63 : vector<2x8xf32>
    %c2_29 = arith.constant 2 : index
    %65 = memref.load %arg6[%c2_29] : memref<11xf32, #tpu.memory_space<smem>>
    %66 = vector.broadcast %65 : f32 to vector<2x8xf32>
    %67 = arith.mulf %64, %66 : vector<2x8xf32>
    %68 = arith.addf %49, %67 : vector<2x8xf32>
    %cst_30 = arith.constant -5.000000e+01 : f32
    %69 = vector.broadcast %cst_30 : f32 to vector<2x8x16xf32>
    %70 = arith.mulf %12, %69 : vector<2x8x16xf32>
    %cst_31 = arith.constant 5.000000e+01 : f32
    %71 = vector.broadcast %cst_31 : f32 to vector<2x8x16xf32>
    %72 = arith.mulf %11, %71 : vector<2x8x16xf32>
    %73 = arith.addf %70, %72 : vector<2x8x16xf32>
    %cst_32 = arith.constant -1.250000e+01 : f32
    %74 = vector.broadcast %cst_32 : f32 to vector<2x8x16xf32>
    %75 = arith.addf %73, %74 : vector<2x8x16xf32>
    %76 = math.exp %75 : vector<2x8x16xf32>
    %cst_33 = arith.constant dense<0.000000e+00> : vector<2x8xf32>
    %77 = vector.multi_reduction <add>, %76, %cst_33 [2] : vector<2x8x16xf32> to vector<2x8xf32>
    %c3 = arith.constant 3 : index
    %78 = memref.load %arg5[%c3] : memref<11xf32, #tpu.memory_space<smem>>
    %79 = vector.broadcast %78 : f32 to vector<2x8xf32>
    %80 = arith.mulf %77, %79 : vector<2x8xf32>
    %cst_34 = arith.constant 1.000000e-10 : f32
    %81 = vector.broadcast %cst_34 : f32 to vector<2x8xf32>
    %82 = arith.maximumf %80, %81 : vector<2x8xf32>
    %83 = math.log %82 : vector<2x8xf32>
    %c3_35 = arith.constant 3 : index
    %84 = memref.load %arg6[%c3_35] : memref<11xf32, #tpu.memory_space<smem>>
    %85 = vector.broadcast %84 : f32 to vector<2x8xf32>
    %86 = arith.mulf %83, %85 : vector<2x8xf32>
    %87 = arith.addf %68, %86 : vector<2x8xf32>
    %cst_36 = arith.constant -5.000000e+01 : f32
    %88 = vector.broadcast %cst_36 : f32 to vector<2x8x16xf32>
    %89 = arith.mulf %12, %88 : vector<2x8x16xf32>
    %cst_37 = arith.constant 3.000000e+01 : f32
    %90 = vector.broadcast %cst_37 : f32 to vector<2x8x16xf32>
    %91 = arith.mulf %11, %90 : vector<2x8x16xf32>
    %92 = arith.addf %89, %91 : vector<2x8x16xf32>
    %cst_38 = arith.constant -4.500000e+00 : f32
    %93 = vector.broadcast %cst_38 : f32 to vector<2x8x16xf32>
    %94 = arith.addf %92, %93 : vector<2x8x16xf32>
    %95 = math.exp %94 : vector<2x8x16xf32>
    %cst_39 = arith.constant dense<0.000000e+00> : vector<2x8xf32>
    %96 = vector.multi_reduction <add>, %95, %cst_39 [2] : vector<2x8x16xf32> to vector<2x8xf32>
    %c4 = arith.constant 4 : index
    %97 = memref.load %arg5[%c4] : memref<11xf32, #tpu.memory_space<smem>>
    %98 = vector.broadcast %97 : f32 to vector<2x8xf32>
    %99 = arith.mulf %96, %98 : vector<2x8xf32>
    %cst_40 = arith.constant 1.000000e-10 : f32
    %100 = vector.broadcast %cst_40 : f32 to vector<2x8xf32>
    %101 = arith.maximumf %99, %100 : vector<2x8xf32>
    %102 = math.log %101 : vector<2x8xf32>
    %c4_41 = arith.constant 4 : index
    %103 = memref.load %arg6[%c4_41] : memref<11xf32, #tpu.memory_space<smem>>
    %104 = vector.broadcast %103 : f32 to vector<2x8xf32>
    %105 = arith.mulf %102, %104 : vector<2x8xf32>
    %106 = arith.addf %87, %105 : vector<2x8xf32>
    %cst_42 = arith.constant -5.000000e+01 : f32
    %107 = vector.broadcast %cst_42 : f32 to vector<2x8x16xf32>
    %108 = arith.mulf %12, %107 : vector<2x8x16xf32>
    %cst_43 = arith.constant 1.000000e+01 : f32
    %109 = vector.broadcast %cst_43 : f32 to vector<2x8x16xf32>
    %110 = arith.mulf %11, %109 : vector<2x8x16xf32>
    %111 = arith.addf %108, %110 : vector<2x8x16xf32>
    %cst_44 = arith.constant -5.000000e-01 : f32
    %112 = vector.broadcast %cst_44 : f32 to vector<2x8x16xf32>
    %113 = arith.addf %111, %112 : vector<2x8x16xf32>
    %114 = math.exp %113 : vector<2x8x16xf32>
    %cst_45 = arith.constant dense<0.000000e+00> : vector<2x8xf32>
    %115 = vector.multi_reduction <add>, %114, %cst_45 [2] : vector<2x8x16xf32> to vector<2x8xf32>
    %c5 = arith.constant 5 : index
    %116 = memref.load %arg5[%c5] : memref<11xf32, #tpu.memory_space<smem>>
    %117 = vector.broadcast %116 : f32 to vector<2x8xf32>
    %118 = arith.mulf %115, %117 : vector<2x8xf32>
    %cst_46 = arith.constant 1.000000e-10 : f32
    %119 = vector.broadcast %cst_46 : f32 to vector<2x8xf32>
    %120 = arith.maximumf %118, %119 : vector<2x8xf32>
    %121 = math.log %120 : vector<2x8xf32>
    %c5_47 = arith.constant 5 : index
    %122 = memref.load %arg6[%c5_47] : memref<11xf32, #tpu.memory_space<smem>>
    %123 = vector.broadcast %122 : f32 to vector<2x8xf32>
    %124 = arith.mulf %121, %123 : vector<2x8xf32>
    %125 = arith.addf %106, %124 : vector<2x8xf32>
    %cst_48 = arith.constant -5.000000e+01 : f32
    %126 = vector.broadcast %cst_48 : f32 to vector<2x8x16xf32>
    %127 = arith.mulf %12, %126 : vector<2x8x16xf32>
    %cst_49 = arith.constant -1.000000e+01 : f32
    %128 = vector.broadcast %cst_49 : f32 to vector<2x8x16xf32>
    %129 = arith.mulf %11, %128 : vector<2x8x16xf32>
    %130 = arith.addf %127, %129 : vector<2x8x16xf32>
    %cst_50 = arith.constant -5.000000e-01 : f32
    %131 = vector.broadcast %cst_50 : f32 to vector<2x8x16xf32>
    %132 = arith.addf %130, %131 : vector<2x8x16xf32>
    %133 = math.exp %132 : vector<2x8x16xf32>
    %cst_51 = arith.constant dense<0.000000e+00> : vector<2x8xf32>
    %134 = vector.multi_reduction <add>, %133, %cst_51 [2] : vector<2x8x16xf32> to vector<2x8xf32>
    %c6 = arith.constant 6 : index
    %135 = memref.load %arg5[%c6] : memref<11xf32, #tpu.memory_space<smem>>
    %136 = vector.broadcast %135 : f32 to vector<2x8xf32>
    %137 = arith.mulf %134, %136 : vector<2x8xf32>
    %cst_52 = arith.constant 1.000000e-10 : f32
    %138 = vector.broadcast %cst_52 : f32 to vector<2x8xf32>
    %139 = arith.maximumf %137, %138 : vector<2x8xf32>
    %140 = math.log %139 : vector<2x8xf32>
    %c6_53 = arith.constant 6 : index
    %141 = memref.load %arg6[%c6_53] : memref<11xf32, #tpu.memory_space<smem>>
    %142 = vector.broadcast %141 : f32 to vector<2x8xf32>
    %143 = arith.mulf %140, %142 : vector<2x8xf32>
    %144 = arith.addf %125, %143 : vector<2x8xf32>
    %cst_54 = arith.constant -5.000000e+01 : f32
    %145 = vector.broadcast %cst_54 : f32 to vector<2x8x16xf32>
    %146 = arith.mulf %12, %145 : vector<2x8x16xf32>
    %cst_55 = arith.constant -3.000000e+01 : f32
    %147 = vector.broadcast %cst_55 : f32 to vector<2x8x16xf32>
    %148 = arith.mulf %11, %147 : vector<2x8x16xf32>
    %149 = arith.addf %146, %148 : vector<2x8x16xf32>
    %cst_56 = arith.constant -4.500000e+00 : f32
    %150 = vector.broadcast %cst_56 : f32 to vector<2x8x16xf32>
    %151 = arith.addf %149, %150 : vector<2x8x16xf32>
    %152 = math.exp %151 : vector<2x8x16xf32>
    %cst_57 = arith.constant dense<0.000000e+00> : vector<2x8xf32>
    %153 = vector.multi_reduction <add>, %152, %cst_57 [2] : vector<2x8x16xf32> to vector<2x8xf32>
    %c7 = arith.constant 7 : index
    %154 = memref.load %arg5[%c7] : memref<11xf32, #tpu.memory_space<smem>>
    %155 = vector.broadcast %154 : f32 to vector<2x8xf32>
    %156 = arith.mulf %153, %155 : vector<2x8xf32>
    %cst_58 = arith.constant 1.000000e-10 : f32
    %157 = vector.broadcast %cst_58 : f32 to vector<2x8xf32>
    %158 = arith.maximumf %156, %157 : vector<2x8xf32>
    %159 = math.log %158 : vector<2x8xf32>
    %c7_59 = arith.constant 7 : index
    %160 = memref.load %arg6[%c7_59] : memref<11xf32, #tpu.memory_space<smem>>
    %161 = vector.broadcast %160 : f32 to vector<2x8xf32>
    %162 = arith.mulf %159, %161 : vector<2x8xf32>
    %163 = arith.addf %144, %162 : vector<2x8xf32>
    %cst_60 = arith.constant -5.000000e+01 : f32
    %164 = vector.broadcast %cst_60 : f32 to vector<2x8x16xf32>
    %165 = arith.mulf %12, %164 : vector<2x8x16xf32>
    %cst_61 = arith.constant -5.000000e+01 : f32
    %166 = vector.broadcast %cst_61 : f32 to vector<2x8x16xf32>
    %167 = arith.mulf %11, %166 : vector<2x8x16xf32>
    %168 = arith.addf %165, %167 : vector<2x8x16xf32>
    %cst_62 = arith.constant -1.250000e+01 : f32
    %169 = vector.broadcast %cst_62 : f32 to vector<2x8x16xf32>
    %170 = arith.addf %168, %169 : vector<2x8x16xf32>
    %171 = math.exp %170 : vector<2x8x16xf32>
    %cst_63 = arith.constant dense<0.000000e+00> : vector<2x8xf32>
    %172 = vector.multi_reduction <add>, %171, %cst_63 [2] : vector<2x8x16xf32> to vector<2x8xf32>
    %c8 = arith.constant 8 : index
    %173 = memref.load %arg5[%c8] : memref<11xf32, #tpu.memory_space<smem>>
    %174 = vector.broadcast %173 : f32 to vector<2x8xf32>
    %175 = arith.mulf %172, %174 : vector<2x8xf32>
    %cst_64 = arith.constant 1.000000e-10 : f32
    %176 = vector.broadcast %cst_64 : f32 to vector<2x8xf32>
    %177 = arith.maximumf %175, %176 : vector<2x8xf32>
    %178 = math.log %177 : vector<2x8xf32>
    %c8_65 = arith.constant 8 : index
    %179 = memref.load %arg6[%c8_65] : memref<11xf32, #tpu.memory_space<smem>>
    %180 = vector.broadcast %179 : f32 to vector<2x8xf32>
    %181 = arith.mulf %178, %180 : vector<2x8xf32>
    %182 = arith.addf %163, %181 : vector<2x8xf32>
    %cst_66 = arith.constant -5.000000e+01 : f32
    %183 = vector.broadcast %cst_66 : f32 to vector<2x8x16xf32>
    %184 = arith.mulf %12, %183 : vector<2x8x16xf32>
    %cst_67 = arith.constant -7.000000e+01 : f32
    %185 = vector.broadcast %cst_67 : f32 to vector<2x8x16xf32>
    %186 = arith.mulf %11, %185 : vector<2x8x16xf32>
    %187 = arith.addf %184, %186 : vector<2x8x16xf32>
    %cst_68 = arith.constant -24.4999981 : f32
    %188 = vector.broadcast %cst_68 : f32 to vector<2x8x16xf32>
    %189 = arith.addf %187, %188 : vector<2x8x16xf32>
    %190 = math.exp %189 : vector<2x8x16xf32>
    %cst_69 = arith.constant dense<0.000000e+00> : vector<2x8xf32>
    %191 = vector.multi_reduction <add>, %190, %cst_69 [2] : vector<2x8x16xf32> to vector<2x8xf32>
    %c9 = arith.constant 9 : index
    %192 = memref.load %arg5[%c9] : memref<11xf32, #tpu.memory_space<smem>>
    %193 = vector.broadcast %192 : f32 to vector<2x8xf32>
    %194 = arith.mulf %191, %193 : vector<2x8xf32>
    %cst_70 = arith.constant 1.000000e-10 : f32
    %195 = vector.broadcast %cst_70 : f32 to vector<2x8xf32>
    %196 = arith.maximumf %194, %195 : vector<2x8xf32>
    %197 = math.log %196 : vector<2x8xf32>
    %c9_71 = arith.constant 9 : index
    %198 = memref.load %arg6[%c9_71] : memref<11xf32, #tpu.memory_space<smem>>
    %199 = vector.broadcast %198 : f32 to vector<2x8xf32>
    %200 = arith.mulf %197, %199 : vector<2x8xf32>
    %201 = arith.addf %182, %200 : vector<2x8xf32>
    %cst_72 = arith.constant -5.000000e+01 : f32
    %202 = vector.broadcast %cst_72 : f32 to vector<2x8x16xf32>
    %203 = arith.mulf %12, %202 : vector<2x8x16xf32>
    %cst_73 = arith.constant -89.9999924 : f32
    %204 = vector.broadcast %cst_73 : f32 to vector<2x8x16xf32>
    %205 = arith.mulf %11, %204 : vector<2x8x16xf32>
    %206 = arith.addf %203, %205 : vector<2x8x16xf32>
    %cst_74 = arith.constant -40.4999962 : f32
    %207 = vector.broadcast %cst_74 : f32 to vector<2x8x16xf32>
    %208 = arith.addf %206, %207 : vector<2x8x16xf32>
    %209 = math.exp %208 : vector<2x8x16xf32>
    %cst_75 = arith.constant dense<0.000000e+00> : vector<2x8xf32>
    %210 = vector.multi_reduction <add>, %209, %cst_75 [2] : vector<2x8x16xf32> to vector<2x8xf32>
    %c10 = arith.constant 10 : index
    %211 = memref.load %arg5[%c10] : memref<11xf32, #tpu.memory_space<smem>>
    %212 = vector.broadcast %211 : f32 to vector<2x8xf32>
    %213 = arith.mulf %210, %212 : vector<2x8xf32>
    %cst_76 = arith.constant 1.000000e-10 : f32
    %214 = vector.broadcast %cst_76 : f32 to vector<2x8xf32>
    %215 = arith.maximumf %213, %214 : vector<2x8xf32>
    %216 = math.log %215 : vector<2x8xf32>
    %c10_77 = arith.constant 10 : index
    %217 = memref.load %arg6[%c10_77] : memref<11xf32, #tpu.memory_space<smem>>
    %218 = vector.broadcast %217 : f32 to vector<2x8xf32>
    %219 = arith.mulf %216, %218 : vector<2x8xf32>
    %220 = arith.addf %201, %219 : vector<2x8xf32>
    %221 = arith.mulf %220, %2 : vector<2x8xf32>
    %cst_78 = arith.constant 1.000000e+00 : f32
    %222 = vector.broadcast %cst_78 : f32 to vector<8x128xf32>
    %cst_79 = arith.constant dense<0.000000e+00> : vector<2x128xf32>
    %223 = tpu.matmul %221, %222, %cst_79 {dimension_numbers = #tpu.dot_dimension_numbers<[1], [0], [0], [1], [0, 0, 1, 1], [], []>} : vector<2x8xf32>, vector<8x128xf32>, vector<2x128xf32> -> vector<2x128xf32>
    %c0_80 = arith.constant 0 : index
    %c0_81 = arith.constant 0 : index
    %224 = vector.load %arg7[%c0_80, %c0_81] : memref<2x128xf32, #tpu.memory_space<vmem>>, vector<2x128xf32>
    tpu.vector_store %arg7[%c0_80, %c0_81], %223 {strides = array<i32>} : memref<2x128xf32, #tpu.memory_space<vmem>>, vector<2x128xf32>,
    return
  }
  func.func @transform_0(%arg0: i32) -> (i32, i32, i32) {
    %c0_i32 = arith.constant 0 : i32
    %c0_i32_0 = arith.constant 0 : i32
    %c0_i32_1 = arith.constant 0 : i32
    return %arg0, %c0_i32, %c0_i32_0 : i32, i32, i32
  }
  func.func @transform_1(%arg0: i32) -> (i32, i32, i32) {
    %c0_i32 = arith.constant 0 : i32
    %c0_i32_0 = arith.constant 0 : i32
    %c0_i32_1 = arith.constant 0 : i32
    return %arg0, %c0_i32, %c0_i32_0 : i32, i32, i32
  }
  func.func @transform_2(%arg0: i32) -> (i32, i32) {
    %c0_i32 = arith.constant 0 : i32
    %c0_i32_0 = arith.constant 0 : i32
    return %arg0, %c0_i32 : i32, i32
  }
  func.func @transform_3(%arg0: i32) -> (i32, i32) {
    %c0_i32 = arith.constant 0 : i32
    %c0_i32_0 = arith.constant 0 : i32
    return %arg0, %c0_i32 : i32, i32
  }
  func.func @transform_4(%arg0: i32) -> i32 {
    %c0_i32 = arith.constant 0 : i32
    %c0_i32_0 = arith.constant 0 : i32
    return %c0_i32 : i32
  }
  func.func @transform_5(%arg0: i32) -> i32 {
    %c0_i32 = arith.constant 0 : i32
    %c0_i32_0 = arith.constant 0 : i32
    return %c0_i32 : i32
  }
  func.func @transform_6(%arg0: i32) -> (i32, i32) {
    %c0_i32 = arith.constant 0 : i32
    %c0_i32_0 = arith.constant 0 : i32
    return %arg0, %c0_i32 : i32, i32
  }
}

</mosaic_0001>

<llo_original>
// kernel: tk_forward.1
$region0: #{tk_forward.1}
  #allocation0 [shape = 'u32[]', space=smem, size = 0x4, offset = 0x4, fixed_abs, tag = 'smem constant byte address 0x4 - core index']
  #allocation1 [shape = 'u32[72,128]{1,0:T(1,128)}', space=vmem, size = 0x9000, scoped, tag = 'internal scratch']
  %s0 = inlined_call_operand.vmem [shape: bf16[2,8,32], index: 0, kind: input, shape index: {}]
  %s1 = inlined_call_operand.vmem [shape: bf16[2,16,32], index: 1, kind: input, shape index: {}]
  %s2 = inlined_call_operand.vmem [shape: f32[2,8], index: 2, kind: input, shape index: {}]
  %s3 = inlined_call_operand.vmem [shape: f32[2,16], index: 3, kind: input, shape index: {}]
  %s4 = inlined_call_operand.vmem [shape: f32[11], index: 4, kind: input, shape index: {}]
  %s5 = inlined_call_operand.vmem [shape: f32[11], index: 5, kind: input, shape index: {}]
  %s6 = inlined_call_operand.vmem [shape: f32[2,128], index: 6, kind: output, shape index: {}]
  %s7 = sld [smem:[#allocation0]]
  $region42: #{tk_forward.1} parent=0
    _
  %s9 = ssub.s32 1, %s7
  %s10 = scalar_select 0, %s9, %s7
  $region1: #{tk_forward.1} parent=0
    #allocation2 [shape = 'u8[512]{0}', space=smem, size = 0x200, scoped, tag = 'input window, operand 4, single buffered']
    #allocation3 [shape = 's32[1]{0}', space=sflag, size = 0x4, scoped, tag = 'scoped memory for tk_forward.1']
    #allocation4 [shape = 'u8[512]{0}', space=smem, size = 0x200, scoped, tag = 'input window, operand 5, single buffered']
    #allocation5 [shape = 's32[1]{0}', space=sflag, size = 0x4, scoped, tag = 'scoped memory for tk_forward.1']
    %11 = vsyncpa [#allocation3], 0
    %12 = vsyncpa [#allocation5], 0
    // Predicated region
    $region2: #{tk_forward.1} parent=1 // pred_check
      _
    $region3: #{tk_forward.1} parent=1 // pred_check_branch
      %14 = sbr.rel (0) target = $region5
    $region4: #{tk_forward.1} parent=1 // pred_region
      _
    $region5: #{tk_forward.1} parent=1 // pred_fallthru
      _
    // Predicated region
    $region6: #{tk_forward.1} parent=1 // pred_check
      _
    $region7: #{tk_forward.1} parent=1 // pred_check_branch
      %16 = sbr.rel (0) target = $region9
    $region8: #{tk_forward.1} parent=1 // pred_region
      _
    $region9: #{tk_forward.1} parent=1 // pred_fallthru
      _
    // Predicated region
    $region10: #{tk_forward.1} parent=1 // pred_check
      _
    $region11: #{tk_forward.1} parent=1 // pred_check_branch
      %18 = sbr.rel (0) target = $region13
    $region12: #{tk_forward.1} parent=1 // pred_region
      _
    $region13: #{tk_forward.1} parent=1 // pred_fallthru
      _
    // Predicated region
    $region14: #{tk_forward.1} parent=1 // pred_check
      _
    $region15: #{tk_forward.1} parent=1 // pred_check_branch
      %20 = sbr.rel (0) target = $region17
    $region16: #{tk_forward.1} parent=1 // pred_region
      _
    $region17: #{tk_forward.1} parent=1 // pred_fallthru
      _
    // Predicated region
    $region18: #{tk_forward.1} parent=1 // pred_check
      _
    $region19: #{tk_forward.1} parent=1 // pred_check_branch
      %22 = sbr.rel (0) target = $region21
    $region20: #{tk_forward.1} parent=1 // pred_region
      %24 = vsyncadd [#allocation3], 0
      %s26 = sshll.u32 %s4, 4
      %s27 = int_to_ptr.vmem [resolvable:$true] %s26
      %29 = dma.vmem_to_smem %s27, 16, [#allocation2], [#allocation3]
    $region21: #{tk_forward.1} parent=1 // pred_fallthru
      _
    // Predicated region
    $region22: #{tk_forward.1} parent=1 // pred_check
      _
    $region23: #{tk_forward.1} parent=1 // pred_check_branch
      %31 = sbr.rel (0) target = $region25
    $region24: #{tk_forward.1} parent=1 // pred_region
      %33 = vsyncadd [#allocation5], 0
      %s35 = sshll.u32 %s5, 4
      %s36 = int_to_ptr.vmem [resolvable:$true] %s35
      %38 = dma.vmem_to_smem %s36, 16, [#allocation4], [#allocation5]
    $region25: #{tk_forward.1} parent=1 // pred_fallthru
      _
    // Predicated region
    $region26: #{tk_forward.1} parent=1 // pred_check
      _
    $region27: #{tk_forward.1} parent=1 // pred_check_branch
      %40 = sbr.rel (0) target = $region29
    $region28: #{tk_forward.1} parent=1 // pred_region
      %42 = dma.done [#allocation3], 16
    $region29: #{tk_forward.1} parent=1 // pred_fallthru
      _
    // Predicated region
    $region30: #{tk_forward.1} parent=1 // pred_check
      _
    $region31: #{tk_forward.1} parent=1 // pred_check_branch
      %44 = sbr.rel (0) target = $region33
    $region32: #{tk_forward.1} parent=1 // pred_region
      %46 = dma.done [#allocation5], 16
    $region33: #{tk_forward.1} parent=1 // pred_fallthru
      _
    %47 = sfence
    %v49 = vld [vmem:[%s0] sm:$0xf]
    %v50 = vld [vmem:[%s0 + $0x4] sm:$0xf]
    %v51 = vld [vmem:[%s1] sm:$0xf]
    %v52 = vld [vmem:[%s1 + $0x4] sm:$0xf]
    %v53 = vld [vmem:[%s1 + $0x8] sm:$0xf]
    %v54 = vld [vmem:[%s1 + $0xc] sm:$0xf]
    %v55 = vld [vmem:[%s2] sm:$0x3]
    %v56 = vld [vmem:[%s3] sm:$0x3]
    %v59 = vunpack.c.l.b16 %v51
    %v60 = vunpack.c.l.b16 %v52
    %v61 = vpack.c.b16 %v60, %v59
    %vm62 = vcmask 261120
    %v64 = vsel %vm62, %v49, 0
    %v67 = vsel %vm62, %v61, 0
    %69 = vmatpush.bf16.xpose.msra.mxu0 0
    %70 = vmatpush.bf16.xpose.msra.mxu0 0
    %71 = vmatpush.bf16.xpose.msra.mxu0 0
    %72 = vmatpush.bf16.xpose.msra.mxu0 0
    %73 = vmatpush.bf16.xpose.msra.mxu0 0
    %74 = vmatpush.bf16.xpose.msra.mxu0 0
    %75 = vmatpush.bf16.xpose.msra.mxu0 0
    %76 = vmatpush.bf16.xpose.msra.mxu0 %v67
    %77 = vmatmul.bf16.gmra.mxu0 %v64
    %v78 = vpop.f32.mrf.mxu0
    %v79 = vadd.f32 0.0, %v78
    %v80 = vpop.f32.mrf.mxu0
    %81 = vdwg.mxu0
    %v84 = vunpack.c.l.b16 %v53
    %v85 = vunpack.c.l.b16 %v54
    %v86 = vpack.c.b16 %v85, %v84
    %v88 = vsel %vm62, %v50, 0
    %v91 = vsel %vm62, %v86, 0
    %93 = vmatpush.bf16.xpose.msra.mxu0 0
    %94 = vmatpush.bf16.xpose.msra.mxu0 0
    %95 = vmatpush.bf16.xpose.msra.mxu0 0
    %96 = vmatpush.bf16.xpose.msra.mxu0 0
    %97 = vmatpush.bf16.xpose.msra.mxu0 0
    %98 = vmatpush.bf16.xpose.msra.mxu0 0
    %99 = vmatpush.bf16.xpose.msra.mxu0 0
    %100 = vmatpush.bf16.xpose.msra.mxu0 %v91
    %101 = vmatmul.bf16.gmra.mxu0 %v88
    %v102 = vpop.f32.mrf.mxu0
    %v103 = vadd.f32 0.0, %v102
    %v104 = vpop.f32.mrf.mxu0
    %105 = vdwg.mxu0
    %v107 = vrot.slane %v56, 1
    %vm109 = vcmp.gt.f32.partialorder %v56, 0.0
    %vm110 = vcmp.gt.f32.partialorder %v107, 0.0
    %v111 = vsel %vm109, 1, 0
    %v112 = vsel %vm110, 1, 0
    %v113 = vperm.slane %v111, 0
    %v114 = vperm.slane %v112, 0
    %vm115 = vcmp.eq.s32.totalorder %v113, 1
    %vm116 = vcmp.eq.s32.totalorder %v114, 1
    %v117 = vsel %vm115, %v79, -1000.0
    %v118 = vsel %vm116, %v103, -1000.0
    %v119 = vmul.f32 %v117, %v117
    %v120 = vmul.f32 %v118, %v118
    %v121 = vsub.f32 %v117, 1.0
    %v122 = vsub.f32 %v118, 1.0
    %v123 = vmul.f32 %v121, %v121
    %v124 = vmul.f32 %v122, %v122
    %v125 = vmul.f32 %v123, -50000004.0
    %v126 = vmul.f32 %v124, -50000004.0
    %v127 = vmul.f32 %v125, 1.442695
    %v128 = vpow.pop %v127
    %v129 = vmul.f32 %v126, 1.442695
    %v130 = vpow.pop %v129
    %vm131 = vcmask 130048
    %v132 = vsel %vm131, %v128, 0.0
    %133 = vadd.xlane.f32.xlu0 %v132
    %v134 = vpop.xlane.xlu0 %133
    %v135 = vsel %vm131, %v130, 0.0
    %136 = vadd.xlane.f32.xlu0 %v135
    %v137 = vpop.xlane.xlu0 %136
    %s138 = sld [smem:[#allocation2]]
    %v139 = vstv %s138
    %v140 = vmul.f32 %v134, %v139
    %v141 = vmul.f32 %v137, %v139
    %v142 = vmax.f32 %v140, 1e-10
    %v143 = vmax.f32 %v141, 1e-10
    %v144 = vlog2.pop %v142
    %v145 = vmul.f32 %v144, 0.6931472
    %v146 = vlog2.pop %v143
    %v147 = vmul.f32 %v146, 0.6931472
    %s148 = sld [smem:[#allocation4]]
    %v149 = vstv %s148
    %v150 = vmul.f32 %v145, %v149
    %v151 = vmul.f32 %v147, %v149
    %v152 = vadd.f32 %v150, 0.0
    %v153 = vadd.f32 %v151, 0.0
    %v154 = vmul.f32 %v119, -50.0
    %v155 = vmul.f32 %v120, -50.0
    %v156 = vmul.f32 %v117, 89.99999
    %v157 = vmul.f32 %v118, 89.99999
    %v158 = vadd.f32 %v154, %v156
    %v159 = vadd.f32 %v155, %v157
    %v160 = vadd.f32 %v158, -40.499996
    %v161 = vadd.f32 %v159, -40.499996
    %v162 = vmul.f32 %v160, 1.442695
    %v163 = vpow.pop %v162
    %v164 = vmul.f32 %v161, 1.442695
    %v165 = vpow.pop %v164
    %v166 = vsel %vm131, %v163, 0.0
    %167 = vadd.xlane.f32.xlu0 %v166
    %v168 = vpop.xlane.xlu0 %167
    %v169 = vsel %vm131, %v165, 0.0
    %170 = vadd.xlane.f32.xlu0 %v169
    %v171 = vpop.xlane.xlu0 %170
    %s172 = sld [smem:[#allocation2 + $0x1]]
    %v173 = vstv %s172
    %v174 = vmul.f32 %v168, %v173
    %v175 = vmul.f32 %v171, %v173
    %v176 = vmax.f32 %v174, 1e-10
    %v177 = vmax.f32 %v175, 1e-10
    %v178 = vlog2.pop %v176
    %v179 = vmul.f32 %v178, 0.6931472
    %v180 = vlog2.pop %v177
    %v181 = vmul.f32 %v180, 0.6931472
    %s182 = sld [smem:[#allocation4 + $0x1]]
    %v183 = vstv %s182
    %v184 = vmul.f32 %v179, %v183
    %v185 = vmul.f32 %v181, %v183
    %v186 = vadd.f32 %v152, %v184
    %v187 = vadd.f32 %v153, %v185
    %v188 = vmul.f32 %v117, 70.0
    %v189 = vmul.f32 %v118, 70.0
    %v190 = vadd.f32 %v154, %v188
    %v191 = vadd.f32 %v155, %v189
    %v192 = vadd.f32 %v190, -24.499998
    %v193 = vadd.f32 %v191, -24.499998
    %v194 = vmul.f32 %v192, 1.442695
    %v195 = vpow.pop %v194
    %v196 = vmul.f32 %v193, 1.442695
    %v197 = vpow.pop %v196
    %v198 = vsel %vm131, %v195, 0.0
    %199 = vadd.xlane.f32.xlu0 %v198
    %v200 = vpop.xlane.xlu0 %199
    %v201 = vsel %vm131, %v197, 0.0
    %202 = vadd.xlane.f32.xlu0 %v201
    %v203 = vpop.xlane.xlu0 %202
    %s204 = sld [smem:[#allocation2 + $0x2]]
    %v205 = vstv %s204
    %v206 = vmul.f32 %v200, %v205
    %v207 = vmul.f32 %v203, %v205
    %v208 = vmax.f32 %v206, 1e-10
    %v209 = vmax.f32 %v207, 1e-10
    %v210 = vlog2.pop %v208
    %v211 = vmul.f32 %v210, 0.6931472
    %v212 = vlog2.pop %v209
    %v213 = vmul.f32 %v212, 0.6931472
    %s214 = sld [smem:[#allocation4 + $0x2]]
    %v215 = vstv %s214
    %v216 = vmul.f32 %v211, %v215
    %v217 = vmul.f32 %v213, %v215
    %v218 = vadd.f32 %v186, %v216
    %v219 = vadd.f32 %v187, %v217
    %v220 = vmul.f32 %v117, 50.0
    %v221 = vmul.f32 %v118, 50.0
    %v222 = vadd.f32 %v154, %v220
    %v223 = vadd.f32 %v155, %v221
    %v224 = vadd.f32 %v222, -12.5
    %v225 = vadd.f32 %v223, -12.5
    %v226 = vmul.f32 %v224, 1.442695
    %v227 = vpow.pop %v226
    %v228 = vmul.f32 %v225, 1.442695
    %v229 = vpow.pop %v228
    %v230 = vsel %vm131, %v227, 0.0
    %231 = vadd.xlane.f32.xlu0 %v230
    %v232 = vpop.xlane.xlu0 %231
    %v233 = vsel %vm131, %v229, 0.0
    %234 = vadd.xlane.f32.xlu0 %v233
    %v235 = vpop.xlane.xlu0 %234
    %s236 = sld [smem:[#allocation2 + $0x3]]
    %v237 = vstv %s236
    %v238 = vmul.f32 %v232, %v237
    %v239 = vmul.f32 %v235, %v237
    %v240 = vmax.f32 %v238, 1e-10
    %v241 = vmax.f32 %v239, 1e-10
    %v242 = vlog2.pop %v240
    %v243 = vmul.f32 %v242, 0.6931472
    %v244 = vlog2.pop %v241
    %v245 = vmul.f32 %v244, 0.6931472
    %s246 = sld [smem:[#allocation4 + $0x3]]
    %v247 = vstv %s246
    %v248 = vmul.f32 %v243, %v247
    %v249 = vmul.f32 %v245, %v247
    %v250 = vadd.f32 %v218, %v248
    %v251 = vadd.f32 %v219, %v249
    %v252 = vmul.f32 %v117, 30.0
    %v253 = vmul.f32 %v118, 30.0
    %v254 = vadd.f32 %v154, %v252
    %v255 = vadd.f32 %v155, %v253
    %v256 = vadd.f32 %v254, -4.5
    %v257 = vadd.f32 %v255, -4.5
    %v258 = vmul.f32 %v256, 1.442695
    %v259 = vpow.pop %v258
    %v260 = vmul.f32 %v257, 1.442695
    %v261 = vpow.pop %v260
    %v262 = vsel %vm131, %v259, 0.0
    %263 = vadd.xlane.f32.xlu0 %v262
    %v264 = vpop.xlane.xlu0 %263
    %v265 = vsel %vm131, %v261, 0.0
    %266 = vadd.xlane.f32.xlu0 %v265
    %v267 = vpop.xlane.xlu0 %266
    %s268 = sld [smem:[#allocation2 + $0x4]]
    %v269 = vstv %s268
    %v270 = vmul.f32 %v264, %v269
    %v271 = vmul.f32 %v267, %v269
    %v272 = vmax.f32 %v270, 1e-10
    %v273 = vmax.f32 %v271, 1e-10
    %v274 = vlog2.pop %v272
    %v275 = vmul.f32 %v274, 0.6931472
    %v276 = vlog2.pop %v273
    %v277 = vmul.f32 %v276, 0.6931472
    %s278 = sld [smem:[#allocation4 + $0x4]]
    %v279 = vstv %s278
    %v280 = vmul.f32 %v275, %v279
    %v281 = vmul.f32 %v277, %v279
    %v282 = vadd.f32 %v250, %v280
    %v283 = vadd.f32 %v251, %v281
    %v284 = vmul.f32 %v117, 10.0
    %v285 = vmul.f32 %v118, 10.0
    %v286 = vadd.f32 %v154, %v284
    %v287 = vadd.f32 %v155, %v285
    %v288 = vadd.f32 %v286, -0.5
    %v289 = vadd.f32 %v287, -0.5
    %v290 = vmul.f32 %v288, 1.442695
    %v291 = vpow.pop %v290
    %v292 = vmul.f32 %v289, 1.442695
    %v293 = vpow.pop %v292
    %v294 = vsel %vm131, %v291, 0.0
    %295 = vadd.xlane.f32.xlu0 %v294
    %v296 = vpop.xlane.xlu0 %295
    %v297 = vsel %vm131, %v293, 0.0
    %298 = vadd.xlane.f32.xlu0 %v297
    %v299 = vpop.xlane.xlu0 %298
    %s300 = sld [smem:[#allocation2 + $0x5]]
    %v301 = vstv %s300
    %v302 = vmul.f32 %v296, %v301
    %v303 = vmul.f32 %v299, %v301
    %v304 = vmax.f32 %v302, 1e-10
    %v305 = vmax.f32 %v303, 1e-10
    %v306 = vlog2.pop %v304
    %v307 = vmul.f32 %v306, 0.6931472
    %v308 = vlog2.pop %v305
    %v309 = vmul.f32 %v308, 0.6931472
    %s310 = sld [smem:[#allocation4 + $0x5]]
    %v311 = vstv %s310
    %v312 = vmul.f32 %v307, %v311
    %v313 = vmul.f32 %v309, %v311
    %v314 = vadd.f32 %v282, %v312
    %v315 = vadd.f32 %v283, %v313
    %v316 = vmul.f32 %v117, -10.0
    %v317 = vmul.f32 %v118, -10.0
    %v318 = vadd.f32 %v154, %v316
    %v319 = vadd.f32 %v155, %v317
    %v320 = vadd.f32 %v318, -0.5
    %v321 = vadd.f32 %v319, -0.5
    %v322 = vmul.f32 %v320, 1.442695
    %v323 = vpow.pop %v322
    %v324 = vmul.f32 %v321, 1.442695
    %v325 = vpow.pop %v324
    %v326 = vsel %vm131, %v323, 0.0
    %327 = vadd.xlane.f32.xlu0 %v326
    %v328 = vpop.xlane.xlu0 %327
    %v329 = vsel %vm131, %v325, 0.0
    %330 = vadd.xlane.f32.xlu0 %v329
    %v331 = vpop.xlane.xlu0 %330
    %s332 = sld [smem:[#allocation2 + $0x6]]
    %v333 = vstv %s332
    %v334 = vmul.f32 %v328, %v333
    %v335 = vmul.f32 %v331, %v333
    %v336 = vmax.f32 %v334, 1e-10
    %v337 = vmax.f32 %v335, 1e-10
    %v338 = vlog2.pop %v336
    %v339 = vmul.f32 %v338, 0.6931472
    %v340 = vlog2.pop %v337
    %v341 = vmul.f32 %v340, 0.6931472
    %s342 = sld [smem:[#allocation4 + $0x6]]
    %v343 = vstv %s342
    %v344 = vmul.f32 %v339, %v343
    %v345 = vmul.f32 %v341, %v343
    %v346 = vadd.f32 %v314, %v344
    %v347 = vadd.f32 %v315, %v345
    %v348 = vmul.f32 %v117, -30.0
    %v349 = vmul.f32 %v118, -30.0
    %v350 = vadd.f32 %v154, %v348
    %v351 = vadd.f32 %v155, %v349
    %v352 = vadd.f32 %v350, -4.5
    %v353 = vadd.f32 %v351, -4.5
    %v354 = vmul.f32 %v352, 1.442695
    %v355 = vpow.pop %v354
    %v356 = vmul.f32 %v353, 1.442695
    %v357 = vpow.pop %v356
    %v358 = vsel %vm131, %v355, 0.0
    %359 = vadd.xlane.f32.xlu0 %v358
    %v360 = vpop.xlane.xlu0 %359
    %v361 = vsel %vm131, %v357, 0.0
    %362 = vadd.xlane.f32.xlu0 %v361
    %v363 = vpop.xlane.xlu0 %362
    %s364 = sld [smem:[#allocation2 + $0x7]]
    %v365 = vstv %s364
    %v366 = vmul.f32 %v360, %v365
    %v367 = vmul.f32 %v363, %v365
    %v368 = vmax.f32 %v366, 1e-10
    %v369 = vmax.f32 %v367, 1e-10
    %v370 = vlog2.pop %v368
    %v371 = vmul.f32 %v370, 0.6931472
    %v372 = vlog2.pop %v369
    %v373 = vmul.f32 %v372, 0.6931472
    %s374 = sld [smem:[#allocation4 + $0x7]]
    %v375 = vstv %s374
    %v376 = vmul.f32 %v371, %v375
    %v377 = vmul.f32 %v373, %v375
    %v378 = vadd.f32 %v346, %v376
    %v379 = vadd.f32 %v347, %v377
    %v380 = vmul.f32 %v117, -50.0
    %v381 = vmul.f32 %v118, -50.0
    %v382 = vadd.f32 %v154, %v380
    %v383 = vadd.f32 %v155, %v381
    %v384 = vadd.f32 %v382, -12.5
    %v385 = vadd.f32 %v383, -12.5
    %v386 = vmul.f32 %v384, 1.442695
    %v387 = vpow.pop %v386
    %v388 = vmul.f32 %v385, 1.442695
    %v389 = vpow.pop %v388
    %v390 = vsel %vm131, %v387, 0.0
    %391 = vadd.xlane.f32.xlu0 %v390
    %v392 = vpop.xlane.xlu0 %391
    %v393 = vsel %vm131, %v389, 0.0
    %394 = vadd.xlane.f32.xlu0 %v393
    %v395 = vpop.xlane.xlu0 %394
    %s396 = sld [smem:[#allocation2 + $0x8]]
    %v397 = vstv %s396
    %v398 = vmul.f32 %v392, %v397
    %v399 = vmul.f32 %v395, %v397
    %v400 = vmax.f32 %v398, 1e-10
    %v401 = vmax.f32 %v399, 1e-10
    %v402 = vlog2.pop %v400
    %v403 = vmul.f32 %v402, 0.6931472
    %v404 = vlog2.pop %v401
    %v405 = vmul.f32 %v404, 0.6931472
    %s406 = sld [smem:[#allocation4 + $0x8]]
    %v407 = vstv %s406
    %v408 = vmul.f32 %v403, %v407
    %v409 = vmul.f32 %v405, %v407
    %v410 = vadd.f32 %v378, %v408
    %v411 = vadd.f32 %v379, %v409
    %v412 = vmul.f32 %v117, -70.0
    %v413 = vmul.f32 %v118, -70.0
    %v414 = vadd.f32 %v154, %v412
    %v415 = vadd.f32 %v155, %v413
    %v416 = vadd.f32 %v414, -24.499998
    %v417 = vadd.f32 %v415, -24.499998
    %v418 = vmul.f32 %v416, 1.442695
    %v419 = vpow.pop %v418
    %v420 = vmul.f32 %v417, 1.442695
    %v421 = vpow.pop %v420
    %v422 = vsel %vm131, %v419, 0.0
    %423 = vadd.xlane.f32.xlu0 %v422
    %v424 = vpop.xlane.xlu0 %423
    %v425 = vsel %vm131, %v421, 0.0
    %426 = vadd.xlane.f32.xlu0 %v425
    %v427 = vpop.xlane.xlu0 %426
    %s428 = sld [smem:[#allocation2 + $0x9]]
    %v429 = vstv %s428
    %v430 = vmul.f32 %v424, %v429
    %v431 = vmul.f32 %v427, %v429
    %v432 = vmax.f32 %v430, 1e-10
    %v433 = vmax.f32 %v431, 1e-10
    %v434 = vlog2.pop %v432
    %v435 = vmul.f32 %v434, 0.6931472
    %v436 = vlog2.pop %v433
    %v437 = vmul.f32 %v436, 0.6931472
    %s438 = sld [smem:[#allocation4 + $0x9]]
    %v439 = vstv %s438
    %v440 = vmul.f32 %v435, %v439
    %v441 = vmul.f32 %v437, %v439
    %v442 = vadd.f32 %v410, %v440
    %v443 = vadd.f32 %v411, %v441
    %v444 = vmul.f32 %v117, -89.99999
    %v445 = vmul.f32 %v118, -89.99999
    %v446 = vadd.f32 %v154, %v444
    %v447 = vadd.f32 %v155, %v445
    %v448 = vadd.f32 %v446, -40.499996
    %v449 = vadd.f32 %v447, -40.499996
    %v450 = vmul.f32 %v448, 1.442695
    %v451 = vpow.pop %v450
    %v452 = vmul.f32 %v449, 1.442695
    %v453 = vpow.pop %v452
    %v454 = vsel %vm131, %v451, 0.0
    %455 = vadd.xlane.f32.xlu0 %v454
    %v456 = vpop.xlane.xlu0 %455
    %v457 = vsel %vm131, %v453, 0.0
    %458 = vadd.xlane.f32.xlu0 %v457
    %v459 = vpop.xlane.xlu0 %458
    %s460 = sld [smem:[#allocation2 + $0xa]]
    %v461 = vstv %s460
    %v462 = vmul.f32 %v456, %v461
    %v463 = vmul.f32 %v459, %v461
    %v464 = vmax.f32 %v462, 1e-10
    %v465 = vmax.f32 %v463, 1e-10
    %v466 = vlog2.pop %v464
    %v467 = vmul.f32 %v466, 0.6931472
    %v468 = vlog2.pop %v465
    %v469 = vmul.f32 %v468, 0.6931472
    %s470 = sld [smem:[#allocation4 + $0xa]]
    %v471 = vstv %s470
    %v472 = vmul.f32 %v467, %v471
    %v473 = vmul.f32 %v469, %v471
    %v474 = vadd.f32 %v442, %v472
    %v475 = vadd.f32 %v443, %v473
    %v477 = vperm.slane %v55, 0
    %v478 = vlaneseq
    %v479 = vshrl.u32 %v478, 7
    %481 = vset.pattern.permute.xlu0 %v479
    %482 = vperm.xlu0 %481, %v477
    %v483 = vpop.permute.xlu0 %482
    %v484 = vperm.slane %v55, 1
    %v485 = vlaneseq
    %v486 = vshrl.u32 %v485, 7
    %488 = vset.pattern.permute.xlu0 %v486
    %489 = vperm.xlu0 %488, %v484
    %v490 = vpop.permute.xlu0 %489
    %v493 = vmul.f32 %v474, %v483
    %v494 = vmul.f32 %v475, %v490
    %497 = vset.pattern.permute.xlu0 0
    %498 = vperm.xlu0 %497, %v493
    %v499 = vpop.permute.xlu0 %498
    %500 = vset.pattern.permute.xlu0 0
    %501 = vperm.xlu0 %500, %v494
    %v502 = vpop.permute.xlu0 %501
    %v503 = vlaneseq
    %v504 = vand.u32 %v503, 127
    %v505 = vperm.slane %v499, %v504
    %v506 = vperm.slane %v502, %v504
    %vm507 = vcmask 1041409
    %v508 = vsel %vm507, %v506, %v505
    %vm509 = vcmask 64512
    %v510 = vsel %vm509, %v508, 0
    %512 = vmatpush.msra.mxu0 0.0
    %513 = vmatpush.msra.mxu0 0.0
    %514 = vmatpush.msra.mxu0 0.0
    %515 = vmatpush.msra.mxu0 0.0
    %516 = vmatpush.msra.mxu0 0.0
    %517 = vmatpush.msra.mxu0 0.0
    %518 = vmatpush.msra.mxu0 0.0
    %519 = vmatpush.msra.mxu0 0.0
    %520 = vmatpush.msra.mxu0 0.0
    %521 = vmatpush.msra.mxu0 0.0
    %522 = vmatpush.msra.mxu0 0.0
    %523 = vmatpush.msra.mxu0 0.0
    %524 = vmatpush.msra.mxu0 0.0
    %525 = vmatpush.msra.mxu0 0.0
    %526 = vmatpush.msra.mxu0 0.0
    %527 = vmatpush.msra.mxu0 1.0
    %528 = vmatmul.f32.gmra.mxu0 %v510
    %v529 = vpop.f32.mrf.mxu0
    %v530 = vadd.f32 0.0, %v529
    %531 = vdwg.mxu0
    %532 = vst [vmem:[%s6] sm:$0x3] %v530
    // Predicated region
    $region34: #{tk_forward.1} parent=1 // pred_check
      _
    $region35: #{tk_forward.1} parent=1 // pred_check_branch
      %534 = sbr.rel (0) target = $region37
    $region36: #{tk_forward.1} parent=1 // pred_region
      _
    $region37: #{tk_forward.1} parent=1 // pred_fallthru
      _
    // Predicated region
    $region38: #{tk_forward.1} parent=1 // pred_check
      _
    $region39: #{tk_forward.1} parent=1 // pred_check_branch
      %536 = sbr.rel (0) target = $region41
    $region40: #{tk_forward.1} parent=1 // pred_region
      _
    $region41: #{tk_forward.1} parent=1 // pred_fallthru
      _
    %537 = vsyncpa [#allocation3], 1
    %538 = vsyncpa [#allocation5], 1

</llo_original>
